<compile_context>
chip_gen: v7x
topology: tpu7x:2x2x1
jax: 0.10.0
libtpu: 0.0.40
codegen_flags: <defaults>
</compile_context>

<pallas_src>
import functools
import math

import jax
import jax.numpy as jnp
from jax import lax
from jax.experimental import pallas as pl
from jax.experimental.pallas import tpu as pltpu


# ----------------------------------------------------------------------------
# Helpers
# ----------------------------------------------------------------------------
def _pick_row_tile(n, max_tile=512):
    """Largest tile <= max_tile that divides n (bounds VMEM at T*N)."""
    for t in (512, 256, 128, 64, 32, 16, 8):
        if t <= max_tile and t <= n and n % t == 0:
            return t
    return n  # TODO(synk): pad N to a multiple of 8 for huge irregular graphs.


def _attn_rows(a):
    """a: (H, D) -> (H, H*D) block structure: row h holds a[h] at cols h*D:(h+1)*D."""
    H, D = a.shape
    eye = jnp.eye(H, dtype=a.dtype)
    return (eye[:, :, None] * a[None, :, :]).reshape(H, H * D)


def make_layer_params(w_t, attn_l, attn_r, num_heads, out_dim):
    """w_t: (F_in, H*D) == fc.weight.T ; attn_l/attn_r: (H, 1, D)."""
    H, D = num_heads, out_dim
    al_rows = _attn_rows(attn_l.reshape(H, D))      # (H, H*D)
    ar_mat = _attn_rows(attn_r.reshape(H, D)).T     # (H*D, H)
    return dict(w=w_t.astype(jnp.bfloat16),          # MXU operand in bf16
                al=al_rows.astype(jnp.float32),
                ar=ar_mat.astype(jnp.float32),
                heads=H, dim=D)


# ----------------------------------------------------------------------------
# Fused GATConv kernel (one grid step == one tile of destination rows)
# ----------------------------------------------------------------------------
def _gat_layer_kernel(x_ref, w_ref, al_ref, ar_ref, bias_ref, *refs,
                      negative_slope, apply_elu, num_heads, out_dim, with_att):
    if with_att:
        rst_ref, att_ref, z_vmem = refs
    else:
        rst_ref, z_vmem = refs
        att_ref = None

    H, D = num_heads, out_dim
    T = rst_ref.shape[0]

    # Fused all-head projection: ONE MXU matmul, bf16 operands, f32 accumulate.
    xb = x_ref[...].astype(jnp.bfloat16)                              # (N, F_in)
    z = jnp.dot(xb, w_ref[...], preferred_element_type=jnp.float32)   # (N, H*D)
    z_vmem[...] = z

    # Attention scores for all heads via two small matmuls:
    #   el_rows[h, j] = <z_h[j], attn_l_h>   (source scores, laid along lanes)
    #   er_tile[i, h] = <z_h[i], attn_r_h>   (destination scores for this tile)
    el_rows = lax.dot_general(al_ref[...], z, (((1,), (1,)), ((), ())),
                              preferred_element_type=jnp.float32)     # (H, N)
    r0 = pl.multiple_of(pl.program_id(0) * T, 8)
    z_tile = z_vmem[pl.ds(r0, T), :]                                  # (T, H*D)
    er_tile = jnp.dot(z_tile, ar_ref[...],
                      preferred_element_type=jnp.float32)             # (T, H)

    bias = bias_ref[...].astype(jnp.float32)     # (T, N): 0 on edges, -1e30 off
    zb = z.astype(jnp.bfloat16)                  # value operand for a @ z

    for h in range(H):                           # H <= 2: statically unrolled
        # e[i, j] = score of edge j(src) -> i(dst)
        e = er_tile[:, h:h + 1] + el_rows[h:h + 1, :]            # (T, N)
        e = jnp.maximum(e, negative_slope * e)                   # LeakyReLU
        e = e + bias                                             # additive mask
        m = jnp.max(e, axis=-1, keepdims=True)                   # (T, 1)
        p = jnp.exp(e - m)                                       # masked -> exact 0
        s = jnp.sum(p, axis=-1, keepdims=True)                   # (T, 1)
        a = p * pl.reciprocal(s, approx=True)                    # edge_softmax
        rst_h = jnp.dot(a.astype(jnp.bfloat16), zb[:, h * D:(h + 1) * D],
                        preferred_element_type=jnp.float32)      # (T, D)
        if apply_elu:
            # ELU (exp-1 lowers cleanly everywhere; expm1 would be slightly
            # more accurate near 0 but is irrelevant at test tolerance).
            rst_h = jnp.where(rst_h > 0, rst_h, jnp.exp(rst_h) - 1.0)
        rst_ref[:, h * D:(h + 1) * D] = rst_h.astype(rst_ref.dtype)
        if att_ref is not None:
            att_ref[h, :, :] = a.astype(att_ref.dtype)


def gat_conv(x, w, al_rows, ar_mat, bias, *, num_heads, out_dim,
             negative_slope=0.2, apply_elu=False, return_att=False,
             max_row_tile=512):
    """One GATConv layer.

    x:        (N, F_in) node features (f32)
    w:        (F_in, H*D) bf16 fused projection (== fc.weight.T)
    al_rows:  (H, H*D) expanded attn_l, ar_mat: (H*D, H) expanded attn_r
    bias:     (N, N) bf16 additive mask, 0 on edges dst<-src, -1e30 otherwise
    returns   rst (N, H*D)  [and att (H, N, N) if return_att]
    """
    N, F_in = x.shape
    H, D = num_heads, out_dim
    HD = H * D
    T = _pick_row_tile(N, max_row_tile)
    grid = (N // T,)

    kernel = functools.partial(
        _gat_layer_kernel, negative_slope=negative_slope, apply_elu=apply_elu,
        num_heads=H, out_dim=D, with_att=return_att)

    rst_shape = jax.ShapeDtypeStruct((N, HD), jnp.float32)
    rst_spec = pl.BlockSpec((T, HD), lambda r: (r, 0))
    if return_att:
        out_shape = (rst_shape, jax.ShapeDtypeStruct((H, N, N), jnp.float32))
        out_specs = (rst_spec, pl.BlockSpec((H, T, N), lambda r: (0, r, 0)))
    else:
        out_shape = rst_shape
        out_specs = rst_spec

    # Scoped VMEM sized to actual blocks (double-buffered) + temporaries, never
    # below the per-generation default, capped below v7x physical (64 MiB).
    est = (2 * (N * F_in * 4 + F_in * HD * 2 + 2 * H * HD * 4
                + T * N * 2 + T * HD * 4
                + (H * T * N * 4 if return_att else 0))
           + N * HD * 6 + 6 * T * N * 4)
    vmem_limit = int(min(max(2 * est, 32 * 2 ** 20), 48 * 2 ** 20))

    out = pl.pallas_call(
        kernel,
        out_shape=out_shape,
        grid_spec=pltpu.PrefetchScalarGridSpec(
            num_scalar_prefetch=0,
            grid=grid,
            in_specs=[
                pl.BlockSpec((N, F_in), lambda r: (0, 0)),    # x (resident)
                pl.BlockSpec((F_in, HD), lambda r: (0, 0)),   # W all heads (bf16)
                pl.BlockSpec((H, HD), lambda r: (0, 0)),      # attn_l rows
                pl.BlockSpec((HD, H), lambda r: (0, 0)),      # attn_r cols
                pl.BlockSpec((T, N), lambda r: (r, 0)),       # additive mask tile
            ],
            out_specs=out_specs,
            scratch_shapes=[pltpu.VMEM((N, HD), jnp.float32)],  # z (all nodes)
        ),
        compiler_params=pltpu.CompilerParams(
            dimension_semantics=("parallel",),                  # row tiles indep.
            vmem_limit_bytes=vmem_limit),
    )(x, w, al_rows, ar_mat, bias)
    return out


# ----------------------------------------------------------------------------
# Full GAT forward (mirrors GAT.forward)
# ----------------------------------------------------------------------------
def gat_forward(x, layers, bias, *, negative_slope=0.2):
    h = x
    for lp in layers[:-1]:                     # hidden GATConv layers (+ ELU)
        h = gat_conv(h, lp["w"], lp["al"], lp["ar"], bias,
                     num_heads=lp["heads"], out_dim=lp["dim"],
                     negative_slope=negative_slope, apply_elu=True,
                     return_att=False)         # (N, H*D) == torch .flatten(1)
    prior = jnp.mean(h, axis=1)                # (N,)

    lp = layers[-1]                            # output layer (no activation)
    rst, att = gat_conv(h, lp["w"], lp["al"], lp["ar"], bias,
                        num_heads=lp["heads"], out_dim=lp["dim"],
                        negative_slope=negative_slope, apply_elu=False,
                        return_att=True)
    N = rst.shape[0]
    logits = jnp.mean(rst.reshape(N, lp["heads"], lp["dim"]), axis=1)
    return logits, prior, att


# ----------------------------------------------------------------------------
# Pure-JAX reference (dense-mask GAT, f32 throughout)
# ----------------------------------------------------------------------------
def _gat_conv_ref(x, w_heads, attn_l, attn_r, adj, negative_slope, apply_elu):
    H, F_in, D = w_heads.shape
    z = jnp.einsum("nf,hfd->nhd", x, w_heads)                  # (N, H, D)
    el = jnp.sum(z * attn_l.reshape(1, H, D), axis=-1)         # (N, H)
    er = jnp.sum(z * attn_r.reshape(1, H, D), axis=-1)         # (N, H)
    e = er[:, None, :] + el[None, :, :]                        # (dst, src, H)
    e = jnp.where(e > 0, e, negative_slope * e)
    mask = adj[:, :, None] > 0
    masked = jnp.where(mask, e, -1e30)
    m = jnp.max(masked, axis=1, keepdims=True)
    p = jnp.exp(masked - m) * adj[:, :, None]
    s = jnp.sum(p, axis=1, keepdims=True)
    a = p / jnp.maximum(s, 1e-30)                              # (N, N, H)
    rst = jnp.einsum("ijh,jhd->ihd", a, z)                     # (N, H, D)
    if apply_elu:
        rst = jnp.where(rst > 0, rst, jnp.exp(rst) - 1.0)
    return rst, jnp.transpose(a, (2, 0, 1))                    # (N,H,D), (H,N,N)


def _gat_forward_ref(x, layers, adj, negative_slope=0.2):
    h = x
    for lp in layers[:-1]:
        rst, _ = _gat_conv_ref(h, lp["w"], lp["al"], lp["ar"], adj,
                               negative_slope, True)
        N, H, D = rst.shape
        h = rst.reshape(N, H * D)
    prior = jnp.mean(h, axis=1)
    lp = layers[-1]
    rst, att = _gat_conv_ref(h, lp["w"], lp["al"], lp["ar"], adj,
                             negative_slope, False)
    logits = jnp.mean(rst, axis=1)
    return logits, prior, att


# ----------------------------------------------------------------------------
if __name__ == "__main__":
    key = jax.random.PRNGKey(0)

    # Small, GAT-consistent shapes.
    N = 64                 # nodes
    in_dim = 32
    num_hidden = 32
    num_classes = 8
    heads = (2, 2, 1)      # 2 hidden GATConv layers + 1 output layer
    negative_slope = 0.2

    # Random graph: Bernoulli adjacency + self loops (no 0-in-degree nodes, as
    # required by the DGL reference).
    key, k_adj, k_x = jax.random.split(key, 3)
    adj = (jax.random.uniform(k_adj, (N, N)) < 0.15).astype(jnp.float32)
    adj = jnp.maximum(adj, jnp.eye(N, dtype=jnp.float32))
    # Additive mask bias shared by all layers (bf16 halves its HBM footprint).
    bias = jnp.where(adj > 0, 0.0, -1e30).astype(jnp.bfloat16)

    x = jax.random.normal(k_x, (N, in_dim), dtype=jnp.float32)

    layer_dims = [
        (in_dim, num_hidden, heads[0]),
        (num_hidden * heads[0], num_hidden, heads[1]),
        (num_hidden * heads[1], num_classes, heads[2]),
    ]

    gain = math.sqrt(2.0)  # nn.init.calculate_gain('relu')
    layers_kernel, layers_ref = [], []
    for (f_in, d_out, h) in layer_dims:
        key, kw, kl, kr = jax.random.split(key, 4)
        std_w = gain * math.sqrt(2.0 / (f_in + h * d_out))     # xavier_normal fc
        w_t = std_w * jax.random.normal(kw, (f_in, h * d_out), dtype=jnp.float32)
        std_a = gain * math.sqrt(2.0 / (h * d_out + 1))        # xavier_normal attn
        al = std_a * jax.random.normal(kl, (h, 1, d_out), dtype=jnp.float32)
        ar = std_a * jax.random.normal(kr, (h, 1, d_out), dtype=jnp.float32)

        layers_kernel.append(make_layer_params(w_t, al, ar, h, d_out))
        w_heads = jnp.transpose(w_t.reshape(f_in, h, d_out), (1, 0, 2))  # (H,F,D)
        layers_ref.append(dict(w=w_heads, al=al, ar=ar))

    logits, prior, att = gat_forward(x, layers_kernel, bias,
                                     negative_slope=negative_slope)
    logits, prior, att = jax.block_until_ready((logits, prior, att))

    # Correctness check against pure-JAX f32 reference (kernel uses bf16 MXU
    # operands + approx reciprocal, hence the slightly looser tolerance).
    logits_ref, prior_ref, att_ref = _gat_forward_ref(
        x, layers_ref, adj, negative_slope=negative_slope)

    assert jnp.allclose(logits, logits_ref, atol=3e-2, rtol=3e-2), "logits mismatch"
    assert jnp.allclose(prior, prior_ref, atol=3e-2, rtol=3e-2), "prior mismatch"
    assert jnp.allclose(att, att_ref, atol=3e-2, rtol=3e-2), "attention mismatch"

    # TODO(synk): attention is returned dense as (H, N_dst, N_src) instead of
    # DGL's per-edge list (E, H); dropout layers are identity at inference.
    print("KERNEL_OK")
</pallas_src>

<mosaic_0001>
module attributes {stable_mosaic.version = 11 : i64} {
  func.func @_gat_layer_kernel(%arg0: i32, %arg1: memref<64x32xf32, #tpu.memory_space<vmem>>, %arg2: memref<32x64xbf16, #tpu.memory_space<vmem>>, %arg3: memref<2x64xf32, #tpu.memory_space<vmem>>, %arg4: memref<64x2xf32, #tpu.memory_space<vmem>>, %arg5: memref<64x64xbf16, #tpu.memory_space<vmem>>, %arg6: memref<64x64xf32, #tpu.memory_space<vmem>>, %arg7: memref<64x64xf32, #tpu.memory_space<vmem>>) attributes {dimension_semantics = [#tpu.dimension_semantics<parallel>], iteration_bounds = array<i64: 1>, scalar_prefetch = 0 : i64, scratch_operands = 1 : i64, tpu.core_type = #tpu.core_type<tc>, window_params = [{pipeline_mode = #tpu.pipeline_mode<synchronous>, transform_indices = @transform_0, window_bounds = array<i64: 64, 32>}, {pipeline_mode = #tpu.pipeline_mode<synchronous>, transform_indices = @transform_1, window_bounds = array<i64: 32, 64>}, {pipeline_mode = #tpu.pipeline_mode<synchronous>, transform_indices = @transform_2, window_bounds = array<i64: 2, 64>}, {pipeline_mode = #tpu.pipeline_mode<synchronous>, transform_indices = @transform_3, window_bounds = array<i64: 64, 2>}, {transform_indices = @transform_4, window_bounds = array<i64: 64, 64>}, {transform_indices = @transform_5, window_bounds = array<i64: 64, 64>}]} {
    %c0 = arith.constant 0 : index
    %c0_0 = arith.constant 0 : index
    %0 = vector.load %arg1[%c0, %c0_0] : memref<64x32xf32, #tpu.memory_space<vmem>>, vector<64x32xf32>
    %1 = arith.truncf %0 : vector<64x32xf32> to vector<64x32xbf16>
    %c0_1 = arith.constant 0 : index
    %c0_2 = arith.constant 0 : index
    %2 = vector.load %arg2[%c0_1, %c0_2] : memref<32x64xbf16, #tpu.memory_space<vmem>>, vector<32x64xbf16>
    %cst = arith.constant dense<0.000000e+00> : vector<64x64xf32>
    %3 = tpu.matmul %1, %2, %cst {dimension_numbers = #tpu.dot_dimension_numbers<[1], [0], [0], [1], [0, 0, 1, 1], [], []>} : vector<64x32xbf16>, vector<32x64xbf16>, vector<64x64xf32> -> vector<64x64xf32>
    %c0_3 = arith.constant 0 : index
    %c0_4 = arith.constant 0 : index
    %4 = vector.load %arg7[%c0_3, %c0_4] : memref<64x64xf32, #tpu.memory_space<vmem>>, vector<64x64xf32>
    tpu.vector_store %arg7[%c0_3, %c0_4], %3 {strides = array<i32>} : memref<64x64xf32, #tpu.memory_space<vmem>>, vector<64x64xf32>,
    %c0_5 = arith.constant 0 : index
    %c0_6 = arith.constant 0 : index
    %5 = vector.load %arg3[%c0_5, %c0_6] : memref<2x64xf32, #tpu.memory_space<vmem>>, vector<2x64xf32>
    %cst_7 = arith.constant dense<0.000000e+00> : vector<2x64xf32>
    %6 = tpu.matmul %5, %3, %cst_7 {dimension_numbers = #tpu.dot_dimension_numbers<[1], [1], [0], [0], [0, 0, 1, 0], [], []>} : vector<2x64xf32>, vector<64x64xf32>, vector<2x64xf32> -> vector<2x64xf32>
    %c64_i32 = arith.constant 64 : i32
    %7 = arith.muli %arg0, %c64_i32 : i32
    %8 = tpu.assume_multiple %7, 8 : i32
    %9 = arith.index_cast %8 : i32 to index
    %c0_8 = arith.constant 0 : index
    %10 = vector.load %arg7[%9, %c0_8] : memref<64x64xf32, #tpu.memory_space<vmem>>, vector<64x64xf32>
    %c0_9 = arith.constant 0 : index
    %c0_10 = arith.constant 0 : index
    %11 = vector.load %arg4[%c0_9, %c0_10] : memref<64x2xf32, #tpu.memory_space<vmem>>, vector<64x2xf32>
    %cst_11 = arith.constant dense<0.000000e+00> : vector<64x2xf32>
    %12 = tpu.matmul %10, %11, %cst_11 {dimension_numbers = #tpu.dot_dimension_numbers<[1], [0], [0], [1], [0, 0, 1, 1], [], []>} : vector<64x64xf32>, vector<64x2xf32>, vector<64x2xf32> -> vector<64x2xf32>
    %c0_12 = arith.constant 0 : index
    %c0_13 = arith.constant 0 : index
    %13 = vector.load %arg5[%c0_12, %c0_13] : memref<64x64xbf16, #tpu.memory_space<vmem>>, vector<64x64xbf16>
    %14 = arith.extf %13 : vector<64x64xbf16> to vector<64x64xf32>
    %15 = arith.truncf %3 : vector<64x64xf32> to vector<64x64xbf16>
    %16 = vector.extract_strided_slice %12 {offsets = [0, 0], sizes = [64, 1], strides = [1, 1]} : vector<64x2xf32> to vector<64x1xf32>
    %17 = vector.extract_strided_slice %6 {offsets = [0, 0], sizes = [1, 64], strides = [1, 1]} : vector<2x64xf32> to vector<1x64xf32>
    %18 = vector.broadcast %16 : vector<64x1xf32> to vector<64x64xf32>
    %19 = vector.broadcast %17 : vector<1x64xf32> to vector<64x64xf32>
    %20 = arith.addf %18, %19 : vector<64x64xf32>
    %cst_14 = arith.constant 2.000000e-01 : f32
    %21 = vector.broadcast %cst_14 : f32 to vector<64x64xf32>
    %22 = arith.mulf %21, %20 : vector<64x64xf32>
    %23 = arith.maximumf %20, %22 : vector<64x64xf32>
    %24 = arith.addf %23, %14 : vector<64x64xf32>
    %cst_15 = arith.constant dense<0xFF800000> : vector<64xf32>
    %25 = vector.multi_reduction <maximumf>, %24, %cst_15 [1] : vector<64x64xf32> to vector<64xf32>
    %26 = vector.shape_cast %25 : vector<64xf32> to vector<64x1xf32>
    %27 = vector.broadcast %26 : vector<64x1xf32> to vector<64x64xf32>
    %28 = arith.subf %24, %27 : vector<64x64xf32>
    %29 = math.exp %28 : vector<64x64xf32>
    %cst_16 = arith.constant dense<0.000000e+00> : vector<64xf32>
    %30 = vector.multi_reduction <add>, %29, %cst_16 [1] : vector<64x64xf32> to vector<64xf32>
    %31 = vector.shape_cast %30 : vector<64xf32> to vector<64x1xf32>
    %32 = tpu.reciprocal %31 {approx = true} : vector<64x1xf32> -> vector<64x1xf32>
    %33 = vector.broadcast %32 : vector<64x1xf32> to vector<64x64xf32>
    %34 = arith.mulf %29, %33 : vector<64x64xf32>
    %35 = arith.truncf %34 : vector<64x64xf32> to vector<64x64xbf16>
    %36 = vector.extract_strided_slice %15 {offsets = [0, 0], sizes = [64, 32], strides = [1, 1]} : vector<64x64xbf16> to vector<64x32xbf16>
    %cst_17 = arith.constant dense<0.000000e+00> : vector<64x32xf32>
    %37 = tpu.matmul %35, %36, %cst_17 {dimension_numbers = #tpu.dot_dimension_numbers<[1], [0], [0], [1], [0, 0, 1, 1], [], []>} : vector<64x64xbf16>, vector<64x32xbf16>, vector<64x32xf32> -> vector<64x32xf32>
    %cst_18 = arith.constant 0.000000e+00 : f32
    %38 = vector.broadcast %cst_18 : f32 to vector<64x32xf32>
    %39 = arith.cmpf ogt, %37, %38 : vector<64x32xf32>
    %40 = math.exp %37 : vector<64x32xf32>
    %cst_19 = arith.constant 1.000000e+00 : f32
    %41 = vector.broadcast %cst_19 : f32 to vector<64x32xf32>
    %42 = arith.subf %40, %41 : vector<64x32xf32>
    %43 = arith.select %39, %37, %42 : vector<64x32xi1>, vector<64x32xf32>
    %c0_20 = arith.constant 0 : index
    %c0_21 = arith.constant 0 : index
    %44 = vector.load %arg6[%c0_20, %c0_21] : memref<64x64xf32, #tpu.memory_space<vmem>>, vector<64x32xf32>
    tpu.vector_store %arg6[%c0_20, %c0_21], %43 {strides = array<i32>} : memref<64x64xf32, #tpu.memory_space<vmem>>, vector<64x32xf32>,
    %45 = vector.extract_strided_slice %12 {offsets = [0, 1], sizes = [64, 1], strides = [1, 1]} : vector<64x2xf32> to vector<64x1xf32>
    %46 = vector.extract_strided_slice %6 {offsets = [1, 0], sizes = [1, 64], strides = [1, 1]} : vector<2x64xf32> to vector<1x64xf32>
    %47 = vector.broadcast %45 : vector<64x1xf32> to vector<64x64xf32>
    %48 = vector.broadcast %46 : vector<1x64xf32> to vector<64x64xf32>
    %49 = arith.addf %47, %48 : vector<64x64xf32>
    %cst_22 = arith.constant 2.000000e-01 : f32
    %50 = vector.broadcast %cst_22 : f32 to vector<64x64xf32>
    %51 = arith.mulf %50, %49 : vector<64x64xf32>
    %52 = arith.maximumf %49, %51 : vector<64x64xf32>
    %53 = arith.addf %52, %14 : vector<64x64xf32>
    %cst_23 = arith.constant dense<0xFF800000> : vector<64xf32>
    %54 = vector.multi_reduction <maximumf>, %53, %cst_23 [1] : vector<64x64xf32> to vector<64xf32>
    %55 = vector.shape_cast %54 : vector<64xf32> to vector<64x1xf32>
    %56 = vector.broadcast %55 : vector<64x1xf32> to vector<64x64xf32>
    %57 = arith.subf %53, %56 : vector<64x64xf32>
    %58 = math.exp %57 : vector<64x64xf32>
    %cst_24 = arith.constant dense<0.000000e+00> : vector<64xf32>
    %59 = vector.multi_reduction <add>, %58, %cst_24 [1] : vector<64x64xf32> to vector<64xf32>
    %60 = vector.shape_cast %59 : vector<64xf32> to vector<64x1xf32>
    %61 = tpu.reciprocal %60 {approx = true} : vector<64x1xf32> -> vector<64x1xf32>
    %62 = vector.broadcast %61 : vector<64x1xf32> to vector<64x64xf32>
    %63 = arith.mulf %58, %62 : vector<64x64xf32>
    %64 = arith.truncf %63 : vector<64x64xf32> to vector<64x64xbf16>
    %65 = vector.extract_strided_slice %15 {offsets = [0, 32], sizes = [64, 32], strides = [1, 1]} : vector<64x64xbf16> to vector<64x32xbf16>
    %cst_25 = arith.constant dense<0.000000e+00> : vector<64x32xf32>
    %66 = tpu.matmul %64, %65, %cst_25 {dimension_numbers = #tpu.dot_dimension_numbers<[1], [0], [0], [1], [0, 0, 1, 1], [], []>} : vector<64x64xbf16>, vector<64x32xbf16>, vector<64x32xf32> -> vector<64x32xf32>
    %cst_26 = arith.constant 0.000000e+00 : f32
    %67 = vector.broadcast %cst_26 : f32 to vector<64x32xf32>
    %68 = arith.cmpf ogt, %66, %67 : vector<64x32xf32>
    %69 = math.exp %66 : vector<64x32xf32>
    %cst_27 = arith.constant 1.000000e+00 : f32
    %70 = vector.broadcast %cst_27 : f32 to vector<64x32xf32>
    %71 = arith.subf %69, %70 : vector<64x32xf32>
    %72 = arith.select %68, %66, %71 : vector<64x32xi1>, vector<64x32xf32>
    %c0_28 = arith.constant 0 : index
    %c32 = arith.constant 32 : index
    %73 = vector.load %arg6[%c0_28, %c32] : memref<64x64xf32, #tpu.memory_space<vmem>>, vector<64x32xf32>
    tpu.vector_store %arg6[%c0_28, %c32], %72 {strides = array<i32>} : memref<64x64xf32, #tpu.memory_space<vmem>>, vector<64x32xf32>,
    return
  }
  func.func @transform_0(%arg0: i32) -> (i32, i32) {
    %c0_i32 = arith.constant 0 : i32
    %c0_i32_0 = arith.constant 0 : i32
    %c0_i32_1 = arith.constant 0 : i32
    return %c0_i32, %c0_i32_0 : i32, i32
  }
  func.func @transform_1(%arg0: i32) -> (i32, i32) {
    %c0_i32 = arith.constant 0 : i32
    %c0_i32_0 = arith.constant 0 : i32
    %c0_i32_1 = arith.constant 0 : i32
    return %c0_i32, %c0_i32_0 : i32, i32
  }
  func.func @transform_2(%arg0: i32) -> (i32, i32) {
    %c0_i32 = arith.constant 0 : i32
    %c0_i32_0 = arith.constant 0 : i32
    %c0_i32_1 = arith.constant 0 : i32
    return %c0_i32, %c0_i32_0 : i32, i32
  }
  func.func @transform_3(%arg0: i32) -> (i32, i32) {
    %c0_i32 = arith.constant 0 : i32
    %c0_i32_0 = arith.constant 0 : i32
    %c0_i32_1 = arith.constant 0 : i32
    return %c0_i32, %c0_i32_0 : i32, i32
  }
  func.func @transform_4(%arg0: i32) -> (i32, i32) {
    %c0_i32 = arith.constant 0 : i32
    %c0_i32_0 = arith.constant 0 : i32
    return %arg0, %c0_i32 : i32, i32
  }
  func.func @transform_5(%arg0: i32) -> (i32, i32) {
    %c0_i32 = arith.constant 0 : i32
    %c0_i32_0 = arith.constant 0 : i32
    return %arg0, %c0_i32 : i32, i32
  }
}

</mosaic_0001>

<llo_original>
// kernel: tpu_custom_call.1
$region0: #{tpu_custom_call.1}
  #allocation0 [shape = 'u32[]', space=smem, size = 0x4, offset = 0x4, fixed_abs, tag = 'smem constant byte address 0x4 - core index']
  #allocation1 [shape = 'u32[144,128]{1,0:T(1,128)}', space=vmem, size = 0x12000, scoped, tag = 'internal scratch']
  #allocation2 [shape = 'f32[64,64]{1,0:T(8,128)}', space=vmem, size = 0x8000, scoped, tag = 'scratch operand']
  %s0 = inlined_call_operand.vmem [shape: f32[64,32], index: 0, kind: input, shape index: {}]
  %s1 = inlined_call_operand.vmem [shape: bf16[32,64], index: 1, kind: input, shape index: {}]
  %s2 = inlined_call_operand.vmem [shape: f32[2,64], index: 2, kind: input, shape index: {}]
  %s3 = inlined_call_operand.vmem [shape: f32[64,2], index: 3, kind: input, shape index: {}]
  %s4 = inlined_call_operand.vmem [shape: bf16[64,64], index: 4, kind: input, shape index: {}]
  %s5 = inlined_call_operand.hbm [shape: f32[64,64], index: 5, kind: output, shape index: {}]
  %s6 = sld [smem:[#allocation0]]
  $region30: #{tpu_custom_call.1} parent=0
    _
  %s8 = ssub.s32 1, %s6
  %s9 = scalar_select 0, %s8, %s6
  $region1: #{tpu_custom_call.1} parent=0
    #allocation3 [shape = 'u8[32768]{0}', space=vmem, size = 0x8000, scoped, tag = 'output window, operand 0, single buffered']
    #allocation4 [shape = 's32[1]{0}', space=sflag, size = 0x4, scoped, tag = 'scoped memory for tpu_custom_call.1']
    %10 = vsyncpa [#allocation4], 0
    // Predicated region
    $region2: #{tpu_custom_call.1} parent=1 // pred_check
      _
    $region3: #{tpu_custom_call.1} parent=1 // pred_check_branch
      %12 = sbr.rel (0) target = $region5
    $region4: #{tpu_custom_call.1} parent=1 // pred_region
      _
    $region5: #{tpu_custom_call.1} parent=1 // pred_fallthru
      _
    // Predicated region
    $region6: #{tpu_custom_call.1} parent=1 // pred_check
      _
    $region7: #{tpu_custom_call.1} parent=1 // pred_check_branch
      %14 = sbr.rel (0) target = $region9
    $region8: #{tpu_custom_call.1} parent=1 // pred_region
      _
    $region9: #{tpu_custom_call.1} parent=1 // pred_fallthru
      _
    // Predicated region
    $region10: #{tpu_custom_call.1} parent=1 // pred_check
      _
    $region11: #{tpu_custom_call.1} parent=1 // pred_check_branch
      %16 = sbr.rel (0) target = $region13
    $region12: #{tpu_custom_call.1} parent=1 // pred_region
      _
    $region13: #{tpu_custom_call.1} parent=1 // pred_fallthru
      _
    // Predicated region
    $region14: #{tpu_custom_call.1} parent=1 // pred_check
      _
    $region15: #{tpu_custom_call.1} parent=1 // pred_check_branch
      %18 = sbr.rel (0) target = $region17
    $region16: #{tpu_custom_call.1} parent=1 // pred_region
      _
    $region17: #{tpu_custom_call.1} parent=1 // pred_fallthru
      _
    // Predicated region
    $region18: #{tpu_custom_call.1} parent=1 // pred_check
      _
    $region19: #{tpu_custom_call.1} parent=1 // pred_check_branch
      %20 = sbr.rel (0) target = $region21
    $region20: #{tpu_custom_call.1} parent=1 // pred_region
      _
    $region21: #{tpu_custom_call.1} parent=1 // pred_fallthru
      _
    %v22 = vld [vmem:[%s0] sm:$0xff]
    %v23 = vld [vmem:[%s0 + $0x8] sm:$0xff]
    %v24 = vld [vmem:[%s0 + $0x10] sm:$0xff]
    %v25 = vld [vmem:[%s0 + $0x18] sm:$0xff]
    %v26 = vld [vmem:[%s0 + $0x20] sm:$0xff]
    %v27 = vld [vmem:[%s0 + $0x28] sm:$0xff]
    %v28 = vld [vmem:[%s0 + $0x30] sm:$0xff]
    %v29 = vld [vmem:[%s0 + $0x38] sm:$0xff]
    %v30 = vpack.c.bf16 %v23, %v22
    %v31 = vpack.c.bf16 %v25, %v24
    %v32 = vpack.c.bf16 %v27, %v26
    %v33 = vpack.c.bf16 %v29, %v28
    %v34 = vld [vmem:[%s1] sm:$0xf]
    %v35 = vld [vmem:[%s1 + $0x4] sm:$0xf]
    %v36 = vld [vmem:[%s1 + $0x8] sm:$0xf]
    %v37 = vld [vmem:[%s1 + $0xc] sm:$0xf]
    %v42 = vunpack.c.l.b16 %v34
    %v43 = vunpack.c.l.b16 %v35
    %v44 = vunpack.c.l.b16 %v36
    %v45 = vunpack.c.l.b16 %v37
    %v46 = vpack.c.b16 %v43, %v42
    %v47 = vpack.c.b16 %v45, %v44
    %vm50 = vcmask 261120
    %v52 = vsel %vm50, %v30, 0
    %v55 = vsel %vm50, %v31, 0
    %v58 = vsel %vm50, %v32, 0
    %v61 = vsel %vm50, %v33, 0
    %63 = vmatprep.subr.bf16.mxu0 0
    %64 = vmatpush1.bf16.msra.mxu0 %v46
    %65 = vmatprep.subr.bf16.mxu0 0
    %66 = vmatpush1.bf16.msra.mxu0 %v47
    %67 = vmatprep.subr.bf16.mxu0 0
    %68 = vmatpush1.bf16.msra.mxu0 0
    %69 = vmatprep.subr.bf16.mxu0 0
    %70 = vmatpush1.bf16.msra.mxu0 0
    %71 = vmatprep.subr.bf16.mxu0 0
    %72 = vmatpush1.bf16.msra.mxu0 0
    %73 = vmatprep.subr.bf16.mxu0 0
    %74 = vmatpush1.bf16.msra.mxu0 0
    %75 = vmatprep.subr.bf16.mxu0 0
    %76 = vmatpush1.bf16.msra.mxu0 0
    %77 = vmatprep.subr.bf16.mxu0 0
    %78 = vmatpush1.bf16.msra.mxu0 0
    %79 = vmatprep.subr.bf16.mxu0 0
    %80 = vmatpush1.bf16.msra.mxu0 0
    %81 = vmatprep.subr.bf16.mxu0 0
    %82 = vmatpush1.bf16.msra.mxu0 0
    %83 = vmatprep.subr.bf16.mxu0 0
    %84 = vmatpush1.bf16.msra.mxu0 0
    %85 = vmatprep.subr.bf16.mxu0 0
    %86 = vmatpush1.bf16.msra.mxu0 0
    %87 = vmatprep.subr.bf16.mxu0 0
    %88 = vmatpush1.bf16.msra.mxu0 0
    %89 = vmatprep.subr.bf16.mxu0 0
    %90 = vmatpush1.bf16.msra.mxu0 0
    %91 = vmatprep.subr.bf16.mxu0 0
    %92 = vmatpush1.bf16.msra.mxu0 0
    %93 = vmatprep.subr.bf16.mxu0 0
    %94 = vmatpush1.bf16.msra.mxu0 0
    %95 = vmatprep.mubr.bf16.mxu0 0
    %96 = vmatmul.mubr.bf16.gmra.mrb[0].mxu0 %v52
    %v97 = vpop.f32.mrb[0].mxu0
    %v98 = vadd.f32 0.0, %v97
    %v99 = vpop.f32.mrb[0].mxu0
    %v100 = vpop.f32.mrb[0].mxu0
    %v101 = vadd.f32 0.0, %v100
    %v102 = vpop.f32.mrb[0].mxu0
    %103 = vmatprep.mubr.bf16.mxu0 0
    %104 = vmatmul.mubr.bf16.gmra.mrb[0].mxu0 %v55
    %v105 = vpop.f32.mrb[0].mxu0
    %v106 = vadd.f32 0.0, %v105
    %v107 = vpop.f32.mrb[0].mxu0
    %v108 = vpop.f32.mrb[0].mxu0
    %v109 = vadd.f32 0.0, %v108
    %v110 = vpop.f32.mrb[0].mxu0
    %111 = vmatprep.mubr.bf16.mxu0 0
    %112 = vmatmul.mubr.bf16.gmra.mrb[0].mxu0 %v58
    %v113 = vpop.f32.mrb[0].mxu0
    %v114 = vadd.f32 0.0, %v113
    %v115 = vpop.f32.mrb[0].mxu0
    %v116 = vpop.f32.mrb[0].mxu0
    %v117 = vadd.f32 0.0, %v116
    %v118 = vpop.f32.mrb[0].mxu0
    %119 = vmatprep.mubr.bf16.mxu0 0
    %120 = vmatmul.mubr.bf16.gmra.mrb[0].mxu0 %v61
    %v121 = vpop.f32.mrb[0].mxu0
    %v122 = vadd.f32 0.0, %v121
    %v123 = vpop.f32.mrb[0].mxu0
    %v124 = vpop.f32.mrb[0].mxu0
    %v125 = vadd.f32 0.0, %v124
    %v126 = vpop.f32.mrb[0].mxu0
    %127 = vdwg.mxu0
    %vm128 = vcmask 523264
    %129 = vst.msk [vmem:[#allocation2] sm:$0xff] %vm128, %v98
    %130 = vst.msk [vmem:[#allocation2 + $0x8] sm:$0xff] %vm128, %v101
    %131 = vst.msk [vmem:[#allocation2 + $0x10] sm:$0xff] %vm128, %v106
    %132 = vst.msk [vmem:[#allocation2 + $0x18] sm:$0xff] %vm128, %v109
    %133 = vst.msk [vmem:[#allocation2 + $0x20] sm:$0xff] %vm128, %v114
    %134 = vst.msk [vmem:[#allocation2 + $0x28] sm:$0xff] %vm128, %v117
    %135 = vst.msk [vmem:[#allocation2 + $0x30] sm:$0xff] %vm128, %v122
    %136 = vst.msk [vmem:[#allocation2 + $0x38] sm:$0xff] %vm128, %v125
    %v137 = vld [vmem:[%s2] sm:$0x3]
    %v139 = vsel %vm128, %v137, 0
    %v142 = vsel %vm128, %v98, 0
    %v145 = vsel %vm128, %v101, 0
    %v148 = vsel %vm128, %v106, 0
    %v151 = vsel %vm128, %v109, 0
    %v154 = vsel %vm128, %v114, 0
    %v157 = vsel %vm128, %v117, 0
    %v160 = vsel %vm128, %v122, 0
    %v163 = vsel %vm128, %v125, 0
    %165 = vmatprep.subr.mxu0 0.0
    %166 = vmatpush1.xpose.msra.mxu0 %v142
    %167 = vmatprep.subr.mxu0 0.0
    %168 = vmatpush1.xpose.msra.mxu0 %v145
    %169 = vmatprep.subr.mxu0 0.0
    %170 = vmatpush1.xpose.msra.mxu0 %v148
    %171 = vmatprep.subr.mxu0 0.0
    %172 = vmatpush1.xpose.msra.mxu0 %v151
    %173 = vmatprep.subr.mxu0 0.0
    %174 = vmatpush1.xpose.msra.mxu0 %v154
    %175 = vmatprep.subr.mxu0 0.0
    %176 = vmatpush1.xpose.msra.mxu0 %v157
    %177 = vmatprep.subr.mxu0 0.0
    %178 = vmatpush1.xpose.msra.mxu0 %v160
    %179 = vmatprep.subr.mxu0 0.0
    %180 = vmatpush1.xpose.msra.mxu0 %v163
    %181 = vmatprep.subr.mxu0 0.0
    %182 = vmatpush1.xpose.msra.mxu0 0.0
    %183 = vmatprep.subr.mxu0 0.0
    %184 = vmatpush1.xpose.msra.mxu0 0.0
    %185 = vmatprep.subr.mxu0 0.0
    %186 = vmatpush1.xpose.msra.mxu0 0.0
    %187 = vmatprep.subr.mxu0 0.0
    %188 = vmatpush1.xpose.msra.mxu0 0.0
    %189 = vmatprep.subr.mxu0 0.0
    %190 = vmatpush1.xpose.msra.mxu0 0.0
    %191 = vmatprep.subr.mxu0 0.0
    %192 = vmatpush1.xpose.msra.mxu0 0.0
    %193 = vmatprep.subr.mxu0 0.0
    %194 = vmatpush1.xpose.msra.mxu0 0.0
    %195 = vmatprep.subr.mxu0 0.0
    %196 = vmatpush1.xpose.msra.mxu0 0.0
    %197 = vmatprep.subr.mxu0 0.0
    %198 = vmatpush1.xpose.msra.mxu0 0.0
    %199 = vmatprep.subr.mxu0 0.0
    %200 = vmatpush1.xpose.msra.mxu0 0.0
    %201 = vmatprep.subr.mxu0 0.0
    %202 = vmatpush1.xpose.msra.mxu0 0.0
    %203 = vmatprep.subr.mxu0 0.0
    %204 = vmatpush1.xpose.msra.mxu0 0.0
    %205 = vmatprep.subr.mxu0 0.0
    %206 = vmatpush1.xpose.msra.mxu0 0.0
    %207 = vmatprep.subr.mxu0 0.0
    %208 = vmatpush1.xpose.msra.mxu0 0.0
    %209 = vmatprep.subr.mxu0 0.0
    %210 = vmatpush1.xpose.msra.mxu0 0.0
    %211 = vmatprep.subr.mxu0 0.0
    %212 = vmatpush1.xpose.msra.mxu0 0.0
    %213 = vmatprep.subr.mxu0 0.0
    %214 = vmatpush1.xpose.msra.mxu0 0.0
    %215 = vmatprep.subr.mxu0 0.0
    %216 = vmatpush1.xpose.msra.mxu0 0.0
    %217 = vmatprep.subr.mxu0 0.0
    %218 = vmatpush1.xpose.msra.mxu0 0.0
    %219 = vmatprep.subr.mxu0 0.0
    %220 = vmatpush1.xpose.msra.mxu0 0.0
    %221 = vmatprep.subr.mxu0 0.0
    %222 = vmatpush1.xpose.msra.mxu0 0.0
    %223 = vmatprep.subr.mxu0 0.0
    %224 = vmatpush1.xpose.msra.mxu0 0.0
    %225 = vmatprep.subr.mxu0 0.0
    %226 = vmatpush1.xpose.msra.mxu0 0.0
    %227 = vmatprep.subr.mxu0 0.0
    %228 = vmatpush1.xpose.msra.mxu0 0.0
    %229 = vmatprep.mubr.f32.mxu0 0.0
    %230 = vmatmul.mubr.f32.gmra.mrb[0].mxu0 %v139
    %v231 = vpop.f32.mrb[0].mxu0
    %v232 = vadd.f32 0.0, %v231
    %v233 = vpop.f32.mrb[0].mxu0
    %234 = vdwg.mxu0
    %s235 = smul.u32 0, 64
    %s236 = scalar_lea.vmem [#allocation2], %s235
    %v237 = vld [vmem:[%s236] sm:$0xff]
    %v238 = vld [vmem:[%s236 + $0x8] sm:$0xff]
    %v239 = vld [vmem:[%s236 + $0x10] sm:$0xff]
    %v240 = vld [vmem:[%s236 + $0x18] sm:$0xff]
    %v241 = vld [vmem:[%s236 + $0x20] sm:$0xff]
    %v242 = vld [vmem:[%s236 + $0x28] sm:$0xff]
    %v243 = vld [vmem:[%s236 + $0x30] sm:$0xff]
    %v244 = vld [vmem:[%s236 + $0x38] sm:$0xff]
    %v245 = vld [vmem:[%s3] sm:$0xff]
    %v246 = vld [vmem:[%s3 + $0x8] sm:$0xff]
    %v247 = vld [vmem:[%s3 + $0x10] sm:$0xff]
    %v248 = vld [vmem:[%s3 + $0x18] sm:$0xff]
    %v249 = vld [vmem:[%s3 + $0x20] sm:$0xff]
    %v250 = vld [vmem:[%s3 + $0x28] sm:$0xff]
    %v251 = vld [vmem:[%s3 + $0x30] sm:$0xff]
    %v252 = vld [vmem:[%s3 + $0x38] sm:$0xff]
    %v254 = vsel %vm128, %v237, 0
    %v257 = vsel %vm128, %v238, 0
    %v260 = vsel %vm128, %v239, 0
    %v263 = vsel %vm128, %v240, 0
    %v266 = vsel %vm128, %v241, 0
    %v269 = vsel %vm128, %v242, 0
    %v272 = vsel %vm128, %v243, 0
    %v275 = vsel %vm128, %v244, 0
    %277 = vmatprep.subr.mxu0 0.0
    %278 = vmatpush1.msra.mxu0 %v245
    %279 = vmatprep.subr.mxu0 0.0
    %280 = vmatpush1.msra.mxu0 %v246
    %281 = vmatprep.subr.mxu0 0.0
    %282 = vmatpush1.msra.mxu0 %v247
    %283 = vmatprep.subr.mxu0 0.0
    %284 = vmatpush1.msra.mxu0 %v248
    %285 = vmatprep.subr.mxu0 0.0
    %286 = vmatpush1.msra.mxu0 %v249
    %287 = vmatprep.subr.mxu0 0.0
    %288 = vmatpush1.msra.mxu0 %v250
    %289 = vmatprep.subr.mxu0 0.0
    %290 = vmatpush1.msra.mxu0 %v251
    %291 = vmatprep.subr.mxu0 0.0
    %292 = vmatpush1.msra.mxu0 %v252
    %293 = vmatprep.subr.mxu0 0.0
    %294 = vmatpush1.msra.mxu0 0.0
    %295 = vmatprep.subr.mxu0 0.0
    %296 = vmatpush1.msra.mxu0 0.0
    %297 = vmatprep.subr.mxu0 0.0
    %298 = vmatpush1.msra.mxu0 0.0
    %299 = vmatprep.subr.mxu0 0.0
    %300 = vmatpush1.msra.mxu0 0.0
    %301 = vmatprep.subr.mxu0 0.0
    %302 = vmatpush1.msra.mxu0 0.0
    %303 = vmatprep.subr.mxu0 0.0
    %304 = vmatpush1.msra.mxu0 0.0
    %305 = vmatprep.subr.mxu0 0.0
    %306 = vmatpush1.msra.mxu0 0.0
    %307 = vmatprep.subr.mxu0 0.0
    %308 = vmatpush1.msra.mxu0 0.0
    %309 = vmatprep.subr.mxu0 0.0
    %310 = vmatpush1.msra.mxu0 0.0
    %311 = vmatprep.subr.mxu0 0.0
    %312 = vmatpush1.msra.mxu0 0.0
    %313 = vmatprep.subr.mxu0 0.0
    %314 = vmatpush1.msra.mxu0 0.0
    %315 = vmatprep.subr.mxu0 0.0
    %316 = vmatpush1.msra.mxu0 0.0
    %317 = vmatprep.subr.mxu0 0.0
    %318 = vmatpush1.msra.mxu0 0.0
    %319 = vmatprep.subr.mxu0 0.0
    %320 = vmatpush1.msra.mxu0 0.0
    %321 = vmatprep.subr.mxu0 0.0
    %322 = vmatpush1.msra.mxu0 0.0
    %323 = vmatprep.subr.mxu0 0.0
    %324 = vmatpush1.msra.mxu0 0.0
    %325 = vmatprep.subr.mxu0 0.0
    %326 = vmatpush1.msra.mxu0 0.0
    %327 = vmatprep.subr.mxu0 0.0
    %328 = vmatpush1.msra.mxu0 0.0
    %329 = vmatprep.subr.mxu0 0.0
    %330 = vmatpush1.msra.mxu0 0.0
    %331 = vmatprep.subr.mxu0 0.0
    %332 = vmatpush1.msra.mxu0 0.0
    %333 = vmatprep.subr.mxu0 0.0
    %334 = vmatpush1.msra.mxu0 0.0
    %335 = vmatprep.subr.mxu0 0.0
    %336 = vmatpush1.msra.mxu0 0.0
    %337 = vmatprep.subr.mxu0 0.0
    %338 = vmatpush1.msra.mxu0 0.0
    %339 = vmatprep.subr.mxu0 0.0
    %340 = vmatpush1.msra.mxu0 0.0
    %341 = vmatprep.mubr.f32.mxu0 0.0
    %342 = vmatmul.mubr.f32.gmra.mrb[0].mxu0 %v254
    %v343 = vpop.f32.mrb[0].mxu0
    %v344 = vadd.f32 0.0, %v343
    %v345 = vpop.f32.mrb[0].mxu0
    %346 = vmatprep.mubr.f32.mxu0 0.0
    %347 = vmatmul.mubr.f32.gmra.mrb[0].mxu0 %v257
    %v348 = vpop.f32.mrb[0].mxu0
    %v349 = vadd.f32 0.0, %v348
    %v350 = vpop.f32.mrb[0].mxu0
    %351 = vmatprep.mubr.f32.mxu0 0.0
    %352 = vmatmul.mubr.f32.gmra.mrb[0].mxu0 %v260
    %v353 = vpop.f32.mrb[0].mxu0
    %v354 = vadd.f32 0.0, %v353
    %v355 = vpop.f32.mrb[0].mxu0
    %356 = vmatprep.mubr.f32.mxu0 0.0
    %357 = vmatmul.mubr.f32.gmra.mrb[0].mxu0 %v263
    %v358 = vpop.f32.mrb[0].mxu0
    %v359 = vadd.f32 0.0, %v358
    %v360 = vpop.f32.mrb[0].mxu0
    %361 = vmatprep.mubr.f32.mxu0 0.0
    %362 = vmatmul.mubr.f32.gmra.mrb[0].mxu0 %v266
    %v363 = vpop.f32.mrb[0].mxu0
    %v364 = vadd.f32 0.0, %v363
    %v365 = vpop.f32.mrb[0].mxu0
    %366 = vmatprep.mubr.f32.mxu0 0.0
    %367 = vmatmul.mubr.f32.gmra.mrb[0].mxu0 %v269
    %v368 = vpop.f32.mrb[0].mxu0
    %v369 = vadd.f32 0.0, %v368
    %v370 = vpop.f32.mrb[0].mxu0
    %371 = vmatprep.mubr.f32.mxu0 0.0
    %372 = vmatmul.mubr.f32.gmra.mrb[0].mxu0 %v272
    %v373 = vpop.f32.mrb[0].mxu0
    %v374 = vadd.f32 0.0, %v373
    %v375 = vpop.f32.mrb[0].mxu0
    %376 = vmatprep.mubr.f32.mxu0 0.0
    %377 = vmatmul.mubr.f32.gmra.mrb[0].mxu0 %v275
    %v378 = vpop.f32.mrb[0].mxu0
    %v379 = vadd.f32 0.0, %v378
    %v380 = vpop.f32.mrb[0].mxu0
    %381 = vdwg.mxu0
    %v382 = vld [vmem:[%s4] sm:$0xf]
    %v383 = vld [vmem:[%s4 + $0x4] sm:$0xf]
    %v384 = vld [vmem:[%s4 + $0x8] sm:$0xf]
    %v385 = vld [vmem:[%s4 + $0xc] sm:$0xf]
    %v386 = vld [vmem:[%s4 + $0x10] sm:$0xf]
    %v387 = vld [vmem:[%s4 + $0x14] sm:$0xf]
    %v388 = vld [vmem:[%s4 + $0x18] sm:$0xf]
    %v389 = vld [vmem:[%s4 + $0x1c] sm:$0xf]
    %v390 = vunpack.c.l.bf16 %v382
    %v391 = vunpack.c.l.bf16 %v383
    %v392 = vunpack.c.l.bf16 %v384
    %v393 = vunpack.c.l.bf16 %v385
    %v394 = vunpack.c.l.bf16 %v386
    %v395 = vunpack.c.l.bf16 %v387
    %v396 = vunpack.c.l.bf16 %v388
    %v397 = vunpack.c.l.bf16 %v389
    %v398 = vpack.c.bf16 %v101, %v98
    %v399 = vpack.c.bf16 %v109, %v106
    %v400 = vpack.c.bf16 %v117, %v114
    %v401 = vpack.c.bf16 %v125, %v122
    %403 = vset.pattern.permute.xlu0 0
    %404 = vperm.xlu0 %403, %v344
    %v405 = vpop.permute.xlu0 %404
    %408 = vset.pattern.permute.xlu0 0
    %409 = vperm.xlu0 %408, %v349
    %v410 = vpop.permute.xlu0 %409
    %413 = vset.pattern.permute.xlu0 0
    %414 = vperm.xlu0 %413, %v354
    %v415 = vpop.permute.xlu0 %414
    %418 = vset.pattern.permute.xlu0 0
    %419 = vperm.xlu0 %418, %v359
    %v420 = vpop.permute.xlu0 %419
    %423 = vset.pattern.permute.xlu0 0
    %424 = vperm.xlu0 %423, %v364
    %v425 = vpop.permute.xlu0 %424
    %428 = vset.pattern.permute.xlu0 0
    %429 = vperm.xlu0 %428, %v369
    %v430 = vpop.permute.xlu0 %429
    %433 = vset.pattern.permute.xlu0 0
    %434 = vperm.xlu0 %433, %v374
    %v435 = vpop.permute.xlu0 %434
    %438 = vset.pattern.permute.xlu0 0
    %439 = vperm.xlu0 %438, %v379
    %v440 = vpop.permute.xlu0 %439
    %v442 = vlaneseq
    %v443 = vshrl.u32 %v442, 7
    %v444 = vsub.s32 0, %v443
    %v445 = vrot.slane %v232, %v444
    %v446 = vadd.f32 %v405, %v445
    %v447 = vadd.f32 %v410, %v445
    %v448 = vadd.f32 %v415, %v445
    %v449 = vadd.f32 %v420, %v445
    %v450 = vadd.f32 %v425, %v445
    %v451 = vadd.f32 %v430, %v445
    %v452 = vadd.f32 %v435, %v445
    %v453 = vadd.f32 %v440, %v445
    %v454 = vmul.f32 %v446, 0.2
    %v455 = vmul.f32 %v447, 0.2
    %v456 = vmul.f32 %v448, 0.2
    %v457 = vmul.f32 %v449, 0.2
    %v458 = vmul.f32 %v450, 0.2
    %v459 = vmul.f32 %v451, 0.2
    %v460 = vmul.f32 %v452, 0.2
    %v461 = vmul.f32 %v453, 0.2
    %v462 = vmax.f32 %v446, %v454
    %v463 = vmax.f32 %v447, %v455
    %v464 = vmax.f32 %v448, %v456
    %v465 = vmax.f32 %v449, %v457
    %v466 = vmax.f32 %v450, %v458
    %v467 = vmax.f32 %v451, %v459
    %v468 = vmax.f32 %v452, %v460
    %v469 = vmax.f32 %v453, %v461
    %v470 = vadd.f32 %v462, %v390
    %v471 = vadd.f32 %v463, %v391
    %v472 = vadd.f32 %v464, %v392
    %v473 = vadd.f32 %v465, %v393
    %v474 = vadd.f32 %v466, %v394
    %v475 = vadd.f32 %v467, %v395
    %v476 = vadd.f32 %v468, %v396
    %v477 = vadd.f32 %v469, %v397
    %v478 = vsel %vm128, %v470, -inf
    %479 = vmax.xlane.f32.xlu0 %v478
    %v480 = vpop.xlane.xlu0 %479
    %v481 = vsel %vm128, %v471, -inf
    %482 = vmax.xlane.f32.xlu0 %v481
    %v483 = vpop.xlane.xlu0 %482
    %v484 = vsel %vm128, %v472, -inf
    %485 = vmax.xlane.f32.xlu0 %v484
    %v486 = vpop.xlane.xlu0 %485
    %v487 = vsel %vm128, %v473, -inf
    %488 = vmax.xlane.f32.xlu0 %v487
    %v489 = vpop.xlane.xlu0 %488
    %v490 = vsel %vm128, %v474, -inf
    %491 = vmax.xlane.f32.xlu0 %v490
    %v492 = vpop.xlane.xlu0 %491
    %v493 = vsel %vm128, %v475, -inf
    %494 = vmax.xlane.f32.xlu0 %v493
    %v495 = vpop.xlane.xlu0 %494
    %v496 = vsel %vm128, %v476, -inf
    %497 = vmax.xlane.f32.xlu0 %v496
    %v498 = vpop.xlane.xlu0 %497
    %v499 = vsel %vm128, %v477, -inf
    %500 = vmax.xlane.f32.xlu0 %v499
    %v501 = vpop.xlane.xlu0 %500
    %v502 = vsub.f32 %v470, %v480
    %v503 = vsub.f32 %v471, %v483
    %v504 = vsub.f32 %v472, %v486
    %v505 = vsub.f32 %v473, %v489
    %v506 = vsub.f32 %v474, %v492
    %v507 = vsub.f32 %v475, %v495
    %v508 = vsub.f32 %v476, %v498
    %v509 = vsub.f32 %v477, %v501
    %v510 = vmul.f32 %v502, 1.442695
    %v511 = vpow.pop %v510
    %v512 = vmul.f32 %v503, 1.442695
    %v513 = vpow.pop %v512
    %v514 = vmul.f32 %v504, 1.442695
    %v515 = vpow.pop %v514
    %v516 = vmul.f32 %v505, 1.442695
    %v517 = vpow.pop %v516
    %v518 = vmul.f32 %v506, 1.442695
    %v519 = vpow.pop %v518
    %v520 = vmul.f32 %v507, 1.442695
    %v521 = vpow.pop %v520
    %v522 = vmul.f32 %v508, 1.442695
    %v523 = vpow.pop %v522
    %v524 = vmul.f32 %v509, 1.442695
    %v525 = vpow.pop %v524
    %v526 = vsel %vm128, %v511, 0.0
    %527 = vadd.xlane.f32.xlu0 %v526
    %v528 = vpop.xlane.xlu0 %527
    %v529 = vsel %vm128, %v513, 0.0
    %530 = vadd.xlane.f32.xlu0 %v529
    %v531 = vpop.xlane.xlu0 %530
    %v532 = vsel %vm128, %v515, 0.0
    %533 = vadd.xlane.f32.xlu0 %v532
    %v534 = vpop.xlane.xlu0 %533
    %v535 = vsel %vm128, %v517, 0.0
    %536 = vadd.xlane.f32.xlu0 %v535
    %v537 = vpop.xlane.xlu0 %536
    %v538 = vsel %vm128, %v519, 0.0
    %539 = vadd.xlane.f32.xlu0 %v538
    %v540 = vpop.xlane.xlu0 %539
    %v541 = vsel %vm128, %v521, 0.0
    %542 = vadd.xlane.f32.xlu0 %v541
    %v543 = vpop.xlane.xlu0 %542
    %v544 = vsel %vm128, %v523, 0.0
    %545 = vadd.xlane.f32.xlu0 %v544
    %v546 = vpop.xlane.xlu0 %545
    %v547 = vsel %vm128, %v525, 0.0
    %548 = vadd.xlane.f32.xlu0 %v547
    %v549 = vpop.xlane.xlu0 %548
    %v550 = vrcp.pop %v528
    %v551 = vrcp.pop %v531
    %v552 = vrcp.pop %v534
    %v553 = vrcp.pop %v537
    %v554 = vrcp.pop %v540
    %v555 = vrcp.pop %v543
    %v556 = vrcp.pop %v546
    %v557 = vrcp.pop %v549
    %v558 = vmul.f32 %v511, %v550
    %v559 = vmul.f32 %v513, %v551
    %v560 = vmul.f32 %v515, %v552
    %v561 = vmul.f32 %v517, %v553
    %v562 = vmul.f32 %v519, %v554
    %v563 = vmul.f32 %v521, %v555
    %v564 = vmul.f32 %v523, %v556
    %v565 = vmul.f32 %v525, %v557
    %v566 = vpack.c.bf16 %v559, %v558
    %v567 = vpack.c.bf16 %v561, %v560
    %v568 = vpack.c.bf16 %v563, %v562
    %v569 = vpack.c.bf16 %v565, %v564
    %v571 = vsel %vm128, %v566, 0
    %v574 = vsel %vm128, %v567, 0
    %v577 = vsel %vm128, %v568, 0
    %v580 = vsel %vm128, %v569, 0
    %582 = vmatprep.subr.bf16.mxu0 0
    %583 = vmatpush1.bf16.msra.mxu0 %v398
    %584 = vmatprep.subr.bf16.mxu0 0
    %585 = vmatpush1.bf16.msra.mxu0 %v399
    %586 = vmatprep.subr.bf16.mxu0 0
    %587 = vmatpush1.bf16.msra.mxu0 %v400
    %588 = vmatprep.subr.bf16.mxu0 0
    %589 = vmatpush1.bf16.msra.mxu0 %v401
    %590 = vmatprep.subr.bf16.mxu0 0
    %591 = vmatpush1.bf16.msra.mxu0 0
    %592 = vmatprep.subr.bf16.mxu0 0
    %593 = vmatpush1.bf16.msra.mxu0 0
    %594 = vmatprep.subr.bf16.mxu0 0
    %595 = vmatpush1.bf16.msra.mxu0 0
    %596 = vmatprep.subr.bf16.mxu0 0
    %597 = vmatpush1.bf16.msra.mxu0 0
    %598 = vmatprep.subr.bf16.mxu0 0
    %599 = vmatpush1.bf16.msra.mxu0 0
    %600 = vmatprep.subr.bf16.mxu0 0
    %601 = vmatpush1.bf16.msra.mxu0 0
    %602 = vmatprep.subr.bf16.mxu0 0
    %603 = vmatpush1.bf16.msra.mxu0 0
    %604 = vmatprep.subr.bf16.mxu0 0
    %605 = vmatpush1.bf16.msra.mxu0 0
    %606 = vmatprep.subr.bf16.mxu0 0
    %607 = vmatpush1.bf16.msra.mxu0 0
    %608 = vmatprep.subr.bf16.mxu0 0
    %609 = vmatpush1.bf16.msra.mxu0 0
    %610 = vmatprep.subr.bf16.mxu0 0
    %611 = vmatpush1.bf16.msra.mxu0 0
    %612 = vmatprep.subr.bf16.mxu0 0
    %613 = vmatpush1.bf16.msra.mxu0 0
    %614 = vmatprep.mubr.bf16.mxu0 0
    %615 = vmatmul.mubr.bf16.gmra.mrb[0].mxu0 %v571
    %v616 = vpop.f32.mrb[0].mxu0
    %v617 = vadd.f32 0.0, %v616
    %v618 = vpop.f32.mrb[0].mxu0
    %v619 = vpop.f32.mrb[0].mxu0
    %v620 = vadd.f32 0.0, %v619
    %v621 = vpop.f32.mrb[0].mxu0
    %622 = vmatprep.mubr.bf16.mxu0 0
    %623 = vmatmul.mubr.bf16.gmra.mrb[0].mxu0 %v574
    %v624 = vpop.f32.mrb[0].mxu0
    %v625 = vadd.f32 0.0, %v624
    %v626 = vpop.f32.mrb[0].mxu0
    %v627 = vpop.f32.mrb[0].mxu0
    %v628 = vadd.f32 0.0, %v627
    %v629 = vpop.f32.mrb[0].mxu0
    %630 = vmatprep.mubr.bf16.mxu0 0
    %631 = vmatmul.mubr.bf16.gmra.mrb[0].mxu0 %v577
    %v632 = vpop.f32.mrb[0].mxu0
    %v633 = vadd.f32 0.0, %v632
    %v634 = vpop.f32.mrb[0].mxu0
    %v635 = vpop.f32.mrb[0].mxu0
    %v636 = vadd.f32 0.0, %v635
    %v637 = vpop.f32.mrb[0].mxu0
    %638 = vmatprep.mubr.bf16.mxu0 0
    %639 = vmatmul.mubr.bf16.gmra.mrb[0].mxu0 %v580
    %v640 = vpop.f32.mrb[0].mxu0
    %v641 = vadd.f32 0.0, %v640
    %v642 = vpop.f32.mrb[0].mxu0
    %v643 = vpop.f32.mrb[0].mxu0
    %v644 = vadd.f32 0.0, %v643
    %v645 = vpop.f32.mrb[0].mxu0
    %646 = vdwg.mxu0
    %vm647 = vcmp.gt.f32.partialorder %v617, 0.0
    %vm648 = vcmp.gt.f32.partialorder %v620, 0.0
    %vm649 = vcmp.gt.f32.partialorder %v625, 0.0
    %vm650 = vcmp.gt.f32.partialorder %v628, 0.0
    %vm651 = vcmp.gt.f32.partialorder %v633, 0.0
    %vm652 = vcmp.gt.f32.partialorder %v636, 0.0
    %vm653 = vcmp.gt.f32.partialorder %v641, 0.0
    %vm654 = vcmp.gt.f32.partialorder %v644, 0.0
    %v655 = vmul.f32 %v617, 1.442695
    %v656 = vpow.pop %v655
    %v657 = vmul.f32 %v620, 1.442695
    %v658 = vpow.pop %v657
    %v659 = vmul.f32 %v625, 1.442695
    %v660 = vpow.pop %v659
    %v661 = vmul.f32 %v628, 1.442695
    %v662 = vpow.pop %v661
    %v663 = vmul.f32 %v633, 1.442695
    %v664 = vpow.pop %v663
    %v665 = vmul.f32 %v636, 1.442695
    %v666 = vpow.pop %v665
    %v667 = vmul.f32 %v641, 1.442695
    %v668 = vpow.pop %v667
    %v669 = vmul.f32 %v644, 1.442695
    %v670 = vpow.pop %v669
    %v671 = vsub.f32 %v656, 1.0
    %v672 = vsub.f32 %v658, 1.0
    %v673 = vsub.f32 %v660, 1.0
    %v674 = vsub.f32 %v662, 1.0
    %v675 = vsub.f32 %v664, 1.0
    %v676 = vsub.f32 %v666, 1.0
    %v677 = vsub.f32 %v668, 1.0
    %v678 = vsub.f32 %v670, 1.0
    %v679 = vsel %vm647, %v617, %v671
    %v680 = vsel %vm648, %v620, %v672
    %v681 = vsel %vm649, %v625, %v673
    %v682 = vsel %vm650, %v628, %v674
    %v683 = vsel %vm651, %v633, %v675
    %v684 = vsel %vm652, %v636, %v676
    %v685 = vsel %vm653, %v641, %v677
    %v686 = vsel %vm654, %v644, %v678
    %687 = vst.msk [vmem:[#allocation3] sm:$0xff] %vm50, %v679
    %688 = vst.msk [vmem:[#allocation3 + $0x8] sm:$0xff] %vm50, %v680
    %689 = vst.msk [vmem:[#allocation3 + $0x10] sm:$0xff] %vm50, %v681
    %690 = vst.msk [vmem:[#allocation3 + $0x18] sm:$0xff] %vm50, %v682
    %691 = vst.msk [vmem:[#allocation3 + $0x20] sm:$0xff] %vm50, %v683
    %692 = vst.msk [vmem:[#allocation3 + $0x28] sm:$0xff] %vm50, %v684
    %693 = vst.msk [vmem:[#allocation3 + $0x30] sm:$0xff] %vm50, %v685
    %694 = vst.msk [vmem:[#allocation3 + $0x38] sm:$0xff] %vm50, %v686
    %695 = vset.pattern.permute.xlu0 1
    %696 = vperm.xlu0 %695, %v344
    %v697 = vpop.permute.xlu0 %696
    %699 = vset.pattern.permute.xlu0 1
    %700 = vperm.xlu0 %699, %v349
    %v701 = vpop.permute.xlu0 %700
    %703 = vset.pattern.permute.xlu0 1
    %704 = vperm.xlu0 %703, %v354
    %v705 = vpop.permute.xlu0 %704
    %707 = vset.pattern.permute.xlu0 1
    %708 = vperm.xlu0 %707, %v359
    %v709 = vpop.permute.xlu0 %708
    %711 = vset.pattern.permute.xlu0 1
    %712 = vperm.xlu0 %711, %v364
    %v713 = vpop.permute.xlu0 %712
    %715 = vset.pattern.permute.xlu0 1
    %716 = vperm.xlu0 %715, %v369
    %v717 = vpop.permute.xlu0 %716
    %719 = vset.pattern.permute.xlu0 1
    %720 = vperm.xlu0 %719, %v374
    %v721 = vpop.permute.xlu0 %720
    %723 = vset.pattern.permute.xlu0 1
    %724 = vperm.xlu0 %723, %v379
    %v725 = vpop.permute.xlu0 %724
    %v727 = vlaneseq
    %v728 = vshrl.u32 %v727, 7
    %v729 = vsub.s32 1, %v728
    %v730 = vrot.slane %v232, %v729
    %v731 = vadd.f32 %v697, %v730
    %v732 = vadd.f32 %v701, %v730
    %v733 = vadd.f32 %v705, %v730
    %v734 = vadd.f32 %v709, %v730
    %v735 = vadd.f32 %v713, %v730
    %v736 = vadd.f32 %v717, %v730
    %v737 = vadd.f32 %v721, %v730
    %v738 = vadd.f32 %v725, %v730
    %v739 = vmul.f32 %v731, 0.2
    %v740 = vmul.f32 %v732, 0.2
    %v741 = vmul.f32 %v733, 0.2
    %v742 = vmul.f32 %v734, 0.2
    %v743 = vmul.f32 %v735, 0.2
    %v744 = vmul.f32 %v736, 0.2
    %v745 = vmul.f32 %v737, 0.2
    %v746 = vmul.f32 %v738, 0.2
    %v747 = vmax.f32 %v731, %v739
    %v748 = vmax.f32 %v732, %v740
    %v749 = vmax.f32 %v733, %v741
    %v750 = vmax.f32 %v734, %v742
    %v751 = vmax.f32 %v735, %v743
    %v752 = vmax.f32 %v736, %v744
    %v753 = vmax.f32 %v737, %v745
    %v754 = vmax.f32 %v738, %v746
    %v755 = vadd.f32 %v747, %v390
    %v756 = vadd.f32 %v748, %v391
    %v757 = vadd.f32 %v749, %v392
    %v758 = vadd.f32 %v750, %v393
    %v759 = vadd.f32 %v751, %v394
    %v760 = vadd.f32 %v752, %v395
    %v761 = vadd.f32 %v753, %v396
    %v762 = vadd.f32 %v754, %v397
    %v763 = vsel %vm128, %v755, -inf
    %764 = vmax.xlane.f32.xlu0 %v763
    %v765 = vpop.xlane.xlu0 %764
    %v766 = vsel %vm128, %v756, -inf
    %767 = vmax.xlane.f32.xlu0 %v766
    %v768 = vpop.xlane.xlu0 %767
    %v769 = vsel %vm128, %v757, -inf
    %770 = vmax.xlane.f32.xlu0 %v769
    %v771 = vpop.xlane.xlu0 %770
    %v772 = vsel %vm128, %v758, -inf
    %773 = vmax.xlane.f32.xlu0 %v772
    %v774 = vpop.xlane.xlu0 %773
    %v775 = vsel %vm128, %v759, -inf
    %776 = vmax.xlane.f32.xlu0 %v775
    %v777 = vpop.xlane.xlu0 %776
    %v778 = vsel %vm128, %v760, -inf
    %779 = vmax.xlane.f32.xlu0 %v778
    %v780 = vpop.xlane.xlu0 %779
    %v781 = vsel %vm128, %v761, -inf
    %782 = vmax.xlane.f32.xlu0 %v781
    %v783 = vpop.xlane.xlu0 %782
    %v784 = vsel %vm128, %v762, -inf
    %785 = vmax.xlane.f32.xlu0 %v784
    %v786 = vpop.xlane.xlu0 %785
    %v787 = vsub.f32 %v755, %v765
    %v788 = vsub.f32 %v756, %v768
    %v789 = vsub.f32 %v757, %v771
    %v790 = vsub.f32 %v758, %v774
    %v791 = vsub.f32 %v759, %v777
    %v792 = vsub.f32 %v760, %v780
    %v793 = vsub.f32 %v761, %v783
    %v794 = vsub.f32 %v762, %v786
    %v795 = vmul.f32 %v787, 1.442695
    %v796 = vpow.pop %v795
    %v797 = vmul.f32 %v788, 1.442695
    %v798 = vpow.pop %v797
    %v799 = vmul.f32 %v789, 1.442695
    %v800 = vpow.pop %v799
    %v801 = vmul.f32 %v790, 1.442695
    %v802 = vpow.pop %v801
    %v803 = vmul.f32 %v791, 1.442695
    %v804 = vpow.pop %v803
    %v805 = vmul.f32 %v792, 1.442695
    %v806 = vpow.pop %v805
    %v807 = vmul.f32 %v793, 1.442695
    %v808 = vpow.pop %v807
    %v809 = vmul.f32 %v794, 1.442695
    %v810 = vpow.pop %v809
    %v811 = vsel %vm128, %v796, 0.0
    %812 = vadd.xlane.f32.xlu0 %v811
    %v813 = vpop.xlane.xlu0 %812
    %v814 = vsel %vm128, %v798, 0.0
    %815 = vadd.xlane.f32.xlu0 %v814
    %v816 = vpop.xlane.xlu0 %815
    %v817 = vsel %vm128, %v800, 0.0
    %818 = vadd.xlane.f32.xlu0 %v817
    %v819 = vpop.xlane.xlu0 %818
    %v820 = vsel %vm128, %v802, 0.0
    %821 = vadd.xlane.f32.xlu0 %v820
    %v822 = vpop.xlane.xlu0 %821
    %v823 = vsel %vm128, %v804, 0.0
    %824 = vadd.xlane.f32.xlu0 %v823
    %v825 = vpop.xlane.xlu0 %824
    %v826 = vsel %vm128, %v806, 0.0
    %827 = vadd.xlane.f32.xlu0 %v826
    %v828 = vpop.xlane.xlu0 %827
    %v829 = vsel %vm128, %v808, 0.0
    %830 = vadd.xlane.f32.xlu0 %v829
    %v831 = vpop.xlane.xlu0 %830
    %v832 = vsel %vm128, %v810, 0.0
    %833 = vadd.xlane.f32.xlu0 %v832
    %v834 = vpop.xlane.xlu0 %833
    %v835 = vrcp.pop %v813
    %v836 = vrcp.pop %v816
    %v837 = vrcp.pop %v819
    %v838 = vrcp.pop %v822
    %v839 = vrcp.pop %v825
    %v840 = vrcp.pop %v828
    %v841 = vrcp.pop %v831
    %v842 = vrcp.pop %v834
    %v843 = vmul.f32 %v796, %v835
    %v844 = vmul.f32 %v798, %v836
    %v845 = vmul.f32 %v800, %v837
    %v846 = vmul.f32 %v802, %v838
    %v847 = vmul.f32 %v804, %v839
    %v848 = vmul.f32 %v806, %v840
    %v849 = vmul.f32 %v808, %v841
    %v850 = vmul.f32 %v810, %v842
    %v851 = vpack.c.bf16 %v844, %v843
    %v852 = vpack.c.bf16 %v846, %v845
    %v853 = vpack.c.bf16 %v848, %v847
    %v854 = vpack.c.bf16 %v850, %v849
    %859 = vrot.lane.b32.xlu0 %v398, 96
    %v860 = vpop.permute.xlu0 %859
    %861 = vrot.lane.b32.xlu0 %v399, 96
    %v862 = vpop.permute.xlu0 %861
    %863 = vrot.lane.b32.xlu0 %v400, 96
    %v864 = vpop.permute.xlu0 %863
    %865 = vrot.lane.b32.xlu0 %v401, 96
    %v866 = vpop.permute.xlu0 %865
    %v872 = vsel %vm128, %v851, 0
    %v875 = vsel %vm128, %v852, 0
    %v878 = vsel %vm128, %v853, 0
    %v881 = vsel %vm128, %v854, 0
    %883 = vmatprep.subr.bf16.mxu0 0
    %884 = vmatpush1.bf16.msra.mxu0 %v860
    %885 = vmatprep.subr.bf16.mxu0 0
    %886 = vmatpush1.bf16.msra.mxu0 %v862
    %887 = vmatprep.subr.bf16.mxu0 0
    %888 = vmatpush1.bf16.msra.mxu0 %v864
    %889 = vmatprep.subr.bf16.mxu0 0
    %890 = vmatpush1.bf16.msra.mxu0 %v866
    %891 = vmatprep.subr.bf16.mxu0 0
    %892 = vmatpush1.bf16.msra.mxu0 0
    %893 = vmatprep.subr.bf16.mxu0 0
    %894 = vmatpush1.bf16.msra.mxu0 0
    %895 = vmatprep.subr.bf16.mxu0 0
    %896 = vmatpush1.bf16.msra.mxu0 0
    %897 = vmatprep.subr.bf16.mxu0 0
    %898 = vmatpush1.bf16.msra.mxu0 0
    %899 = vmatprep.subr.bf16.mxu0 0
    %900 = vmatpush1.bf16.msra.mxu0 0
    %901 = vmatprep.subr.bf16.mxu0 0
    %902 = vmatpush1.bf16.msra.mxu0 0
    %903 = vmatprep.subr.bf16.mxu0 0
    %904 = vmatpush1.bf16.msra.mxu0 0
    %905 = vmatprep.subr.bf16.mxu0 0
    %906 = vmatpush1.bf16.msra.mxu0 0
    %907 = vmatprep.subr.bf16.mxu0 0
    %908 = vmatpush1.bf16.msra.mxu0 0
    %909 = vmatprep.subr.bf16.mxu0 0
    %910 = vmatpush1.bf16.msra.mxu0 0
    %911 = vmatprep.subr.bf16.mxu0 0
    %912 = vmatpush1.bf16.msra.mxu0 0
    %913 = vmatprep.subr.bf16.mxu0 0
    %914 = vmatpush1.bf16.msra.mxu0 0
    %915 = vmatprep.mubr.bf16.mxu0 0
    %916 = vmatmul.mubr.bf16.gmra.mrb[0].mxu0 %v872
    %v917 = vpop.f32.mrb[0].mxu0
    %v918 = vadd.f32 0.0, %v917
    %v919 = vpop.f32.mrb[0].mxu0
    %v920 = vpop.f32.mrb[0].mxu0
    %v921 = vadd.f32 0.0, %v920
    %v922 = vpop.f32.mrb[0].mxu0
    %923 = vmatprep.mubr.bf16.mxu0 0
    %924 = vmatmul.mubr.bf16.gmra.mrb[0].mxu0 %v875
    %v925 = vpop.f32.mrb[0].mxu0
    %v926 = vadd.f32 0.0, %v925
    %v927 = vpop.f32.mrb[0].mxu0
    %v928 = vpop.f32.mrb[0].mxu0
    %v929 = vadd.f32 0.0, %v928
    %v930 = vpop.f32.mrb[0].mxu0
    %931 = vmatprep.mubr.bf16.mxu0 0
    %932 = vmatmul.mubr.bf16.gmra.mrb[0].mxu0 %v878
    %v933 = vpop.f32.mrb[0].mxu0
    %v934 = vadd.f32 0.0, %v933
    %v935 = vpop.f32.mrb[0].mxu0
    %v936 = vpop.f32.mrb[0].mxu0
    %v937 = vadd.f32 0.0, %v936
    %v938 = vpop.f32.mrb[0].mxu0
    %939 = vmatprep.mubr.bf16.mxu0 0
    %940 = vmatmul.mubr.bf16.gmra.mrb[0].mxu0 %v881
    %v941 = vpop.f32.mrb[0].mxu0
    %v942 = vadd.f32 0.0, %v941
    %v943 = vpop.f32.mrb[0].mxu0
    %v944 = vpop.f32.mrb[0].mxu0
    %v945 = vadd.f32 0.0, %v944
    %v946 = vpop.f32.mrb[0].mxu0
    %947 = vdwg.mxu0
    %vm948 = vcmp.gt.f32.partialorder %v918, 0.0
    %vm949 = vcmp.gt.f32.partialorder %v921, 0.0
    %vm950 = vcmp.gt.f32.partialorder %v926, 0.0
    %vm951 = vcmp.gt.f32.partialorder %v929, 0.0
    %vm952 = vcmp.gt.f32.partialorder %v934, 0.0
    %vm953 = vcmp.gt.f32.partialorder %v937, 0.0
    %vm954 = vcmp.gt.f32.partialorder %v942, 0.0
    %vm955 = vcmp.gt.f32.partialorder %v945, 0.0
    %v956 = vmul.f32 %v918, 1.442695
    %v957 = vpow.pop %v956
    %v958 = vmul.f32 %v921, 1.442695
    %v959 = vpow.pop %v958
    %v960 = vmul.f32 %v926, 1.442695
    %v961 = vpow.pop %v960
    %v962 = vmul.f32 %v929, 1.442695
    %v963 = vpow.pop %v962
    %v964 = vmul.f32 %v934, 1.442695
    %v965 = vpow.pop %v964
    %v966 = vmul.f32 %v937, 1.442695
    %v967 = vpow.pop %v966
    %v968 = vmul.f32 %v942, 1.442695
    %v969 = vpow.pop %v968
    %v970 = vmul.f32 %v945, 1.442695
    %v971 = vpow.pop %v970
    %v972 = vsub.f32 %v957, 1.0
    %v973 = vsub.f32 %v959, 1.0
    %v974 = vsub.f32 %v961, 1.0
    %v975 = vsub.f32 %v963, 1.0
    %v976 = vsub.f32 %v965, 1.0
    %v977 = vsub.f32 %v967, 1.0
    %v978 = vsub.f32 %v969, 1.0
    %v979 = vsub.f32 %v971, 1.0
    %v980 = vsel %vm948, %v918, %v972
    %v981 = vsel %vm949, %v921, %v973
    %v982 = vsel %vm950, %v926, %v974
    %v983 = vsel %vm951, %v929, %v975
    %v984 = vsel %vm952, %v934, %v976
    %v985 = vsel %vm953, %v937, %v977
    %v986 = vsel %vm954, %v942, %v978
    %v987 = vsel %vm955, %v945, %v979
    %996 = vrot.lane.b32.xlu0 %v980, 32
    %v997 = vpop.permute.xlu0 %996
    %998 = vrot.lane.b32.xlu0 %v981, 32
    %v999 = vpop.permute.xlu0 %998
    %1000 = vrot.lane.b32.xlu0 %v982, 32
    %v1001 = vpop.permute.xlu0 %1000
    %1002 = vrot.lane.b32.xlu0 %v983, 32
    %v1003 = vpop.permute.xlu0 %1002
    %1004 = vrot.lane.b32.xlu0 %v984, 32
    %v1005 = vpop.permute.xlu0 %1004
    %1006 = vrot.lane.b32.xlu0 %v985, 32
    %v1007 = vpop.permute.xlu0 %1006
    %1008 = vrot.lane.b32.xlu0 %v986, 32
    %v1009 = vpop.permute.xlu0 %1008
    %1010 = vrot.lane.b32.xlu0 %v987, 32
    %v1011 = vpop.permute.xlu0 %1010
    %vm1020 = vcmask 523520
    %1021 = vst.msk [vmem:[#allocation3] sm:$0xff] %vm1020, %v997
    %1022 = vst.msk [vmem:[#allocation3 + $0x8] sm:$0xff] %vm1020, %v999
    %1023 = vst.msk [vmem:[#allocation3 + $0x10] sm:$0xff] %vm1020, %v1001
    %1024 = vst.msk [vmem:[#allocation3 + $0x18] sm:$0xff] %vm1020, %v1003
    %1025 = vst.msk [vmem:[#allocation3 + $0x20] sm:$0xff] %vm1020, %v1005
    %1026 = vst.msk [vmem:[#allocation3 + $0x28] sm:$0xff] %vm1020, %v1007
    %1027 = vst.msk [vmem:[#allocation3 + $0x30] sm:$0xff] %vm1020, %v1009
    %1028 = vst.msk [vmem:[#allocation3 + $0x38] sm:$0xff] %vm1020, %v1011
    // Predicated region
    $region22: #{tpu_custom_call.1} parent=1 // pred_check
      _
    $region23: #{tpu_custom_call.1} parent=1 // pred_check_branch
      %1030 = sbr.rel (0) target = $region25
    $region24: #{tpu_custom_call.1} parent=1 // pred_region
      %s1032 = ssub.s32 1024, 1024
      %1033 = vsyncadd [#allocation4], %s1032
      %s1034 = sshll.u32 [#allocation3], 4
      %s1035 = int_to_ptr.vmem [resolvable:$true] %s1034
      %1040 = dma.vmem_to_hbm [thread:$0]  %s1035, 1024, %s5, [#allocation4], 128, 128, 8
    $region25: #{tpu_custom_call.1} parent=1 // pred_fallthru
      _
    // Predicated region
    $region26: #{tpu_custom_call.1} parent=1 // pred_check
      _
    $region27: #{tpu_custom_call.1} parent=1 // pred_check_branch
      %1042 = sbr.rel (0) target = $region29
    $region28: #{tpu_custom_call.1} parent=1 // pred_region
      %1043 = dma.done [#allocation4], 1024
    $region29: #{tpu_custom_call.1} parent=1 // pred_fallthru
      _
    %1044 = vsyncpa [#allocation4], 1

</llo_original>
